<compile_context>
chip_gen: v6e
topology: v6e:2x2x1
jax: 0.10.0
libtpu: 0.0.40
codegen_flags: <defaults>
</compile_context>

<pallas_src>
import functools

import jax
import jax.numpy as jnp
from jax.experimental import pallas as pl
from jax.experimental.pallas import tpu as pltpu


def _depth_loss_kernel(pred_ref, depth_ref, out_ref, *, valid_h, valid_w):
    Hp, Wp = pred_ref.shape           # padded, (8,128)-aligned, >= (H+1, W+1)
    p = pred_ref[...]                 # (Hp, Wp) f32 model depth (channel 0)
    d = depth_ref[...]                # (Hp, Wp) f32 ground-truth depth

    # ---- Sobel via XLU rolls (separable [1,2,1] (rows) x [1,0,-1] (cols)) --
    # Every shifted neighbour of a *valid* pixel is either a valid pixel or a
    # wrapper-inserted zero, so no boundary masks are needed here and the
    # final loss is independent of the roll wrap direction (dx/dy at most
    # flip sign globally, which cancels in |.| and in the cosine).
    def sobel(x):
        xl = pltpu.roll(x, 1, axis=1)          # x[:, j-1] (zero padded)
        xr = pltpu.roll(x, Wp - 1, axis=1)     # x[:, j+1] (zero padded)
        c_diff = xl - xr                       # [1, 0, -1] along columns
        c_sm = xl + 2.0 * x + xr               # [1, 2, 1]  along columns
        du = pltpu.roll(c_diff, 1, axis=0)     # c_diff[i-1, :]
        dd = pltpu.roll(c_diff, Hp - 1, axis=0)  # c_diff[i+1, :]
        su = pltpu.roll(c_sm, 1, axis=0)
        sd = pltpu.roll(c_sm, Hp - 1, axis=0)
        dx = du + 2.0 * c_diff + dd            # [1, 2, 1]  along rows
        dy = su - sd                           # [1, 0, -1] along rows
        return dx, dy

    pdx, pdy = sobel(p)
    ddx, ddy = sobel(d)

    # ---- fused per-pixel loss: 1 log + 1 rsqrt on the EUP per pixel --------
    t0 = jnp.abs(p - d) + 0.5
    t1 = jnp.abs(pdx - ddx) + 0.5
    t2 = jnp.abs(pdy - ddy) + 0.5
    log_term = jnp.log(t0 * t1 * t2)

    # cosine of normals (-dx, -dy, 1); the constant 1 keeps both norms >= 1,
    # so eps=0 is safe exactly as in the torch module.
    dot_n = pdx * ddx + pdy * ddy + 1.0
    nsq = (pdx * pdx + pdy * pdy + 1.0) * (ddx * ddx + ddy * ddy + 1.0)
    cos = dot_n * jax.lax.rsqrt(nsq)
    loss_map = log_term + jnp.abs(1.0 - cos)

    # mask off padded rows/columns, then a single reduction for this image
    row = jax.lax.broadcasted_iota(jnp.int32, (Hp, Wp), 0)
    col = jax.lax.broadcasted_iota(jnp.int32, (Hp, Wp), 1)
    loss_map = jnp.where((row < valid_h) & (col < valid_w), loss_map, 0.0)

    partial = jnp.sum(loss_map)
    # per-batch partial sum, broadcast to a lane-dense (8, 128) output block
    out_ref[...] = jnp.full(out_ref.shape, partial, dtype=out_ref.dtype)


def _round_up(x, m):
    return (x + m - 1) // m * m


def depth_combined_loss(output, gt):
    """output: (B, C, H, W) prediction; gt: (B, C', H', W') ground truth.

    Matches Depth_combined_loss.forward (channel 0 of output; gt bilinearly
    resized to the output resolution). Returns a scalar f32 loss.
    """
    B, _, H, W = output.shape
    pred = output[:, 0, :, :].astype(jnp.float32)             # (B, H, W)

    # channel 0 only, sliced BEFORE the resize (bilinear is per-channel).
    # TODO(synk): F.interpolate(mode='bilinear', align_corners=False) is done
    # with jax.image.resize (XLA) outside the Pallas kernel.
    gt_f = gt[:, :1, :, :].astype(jnp.float32)
    if gt_f.shape[-2:] != (H, W):
        gt_f = jax.image.resize(gt_f, gt_f.shape[:2] + (H, W),
                                method="bilinear", antialias=False)
    depth = gt_f[:, 0, :, :]                                   # (B, H, W)

    # Pad to (8,128)-aligned tiles with >= 1 extra zero row AND column so the
    # in-kernel rolls see true zero padding at every image boundary.
    Hp = _round_up(H + 1, 8)
    Wp = _round_up(W + 1, 128)
    pad = ((0, 0), (0, Hp - H), (0, Wp - W))
    pred_p = jnp.pad(pred, pad)
    depth_p = jnp.pad(depth, pad)

    map_bytes = Hp * Wp * 4
    vmem_limit = int(min(64 * 2 ** 20, max(32 * 2 ** 20, 20 * map_bytes)))

    partials = pl.pallas_call(
        functools.partial(_depth_loss_kernel, valid_h=H, valid_w=W),
        out_shape=jax.ShapeDtypeStruct((B, 8, 128), jnp.float32),
        grid_spec=pltpu.PrefetchScalarGridSpec(
            num_scalar_prefetch=0,
            grid=(B,),
            in_specs=[
                pl.BlockSpec((None, Hp, Wp), lambda b: (b, 0, 0)),
                pl.BlockSpec((None, Hp, Wp), lambda b: (b, 0, 0)),
            ],
            out_specs=pl.BlockSpec((None, 8, 128), lambda b: (b, 0, 0)),
        ),
        compiler_params=pltpu.CompilerParams(
            dimension_semantics=("parallel",),
            vmem_limit_bytes=vmem_limit),
    )(pred_p, depth_p)

    # tiny final reduction + the shared 1/(B*H*W) of all four mean() terms
    return jnp.sum(partials[:, 0, 0]) * (1.0 / float(B * H * W))


def _reference_loss(output, gt):
    # plain-JAX re-implementation of the PyTorch module for the check
    B, _, H, W = output.shape
    pred = output[:, 0, :, :].astype(jnp.float32)
    gt_f = gt.astype(jnp.float32)
    if gt_f.shape[-2:] != (H, W):
        gt_f = jax.image.resize(gt_f, gt_f.shape[:2] + (H, W),
                                method="bilinear", antialias=False)
    depth = gt_f[:, 0, :, :]

    def sobel(x):
        xp = jnp.pad(x, ((0, 0), (1, 1), (1, 1)))
        w = lambda di, dj: xp[:, 1 + di:1 + di + H, 1 + dj:1 + dj + W]
        dx = (w(-1, -1) - w(-1, 1)) + 2.0 * (w(0, -1) - w(0, 1)) + (w(1, -1) - w(1, 1))
        dy = (w(-1, -1) + 2.0 * w(-1, 0) + w(-1, 1)) - (w(1, -1) + 2.0 * w(1, 0) + w(1, 1))
        return dx, dy

    pdx, pdy = sobel(pred)
    ddx, ddy = sobel(depth)
    loss_depth = jnp.mean(jnp.log(jnp.abs(pred - depth) + 0.5))
    loss_dx = jnp.mean(jnp.log(jnp.abs(pdx - ddx) + 0.5))
    loss_dy = jnp.mean(jnp.log(jnp.abs(pdy - ddy) + 0.5))
    dot_n = pdx * ddx + pdy * ddy + 1.0
    cos = dot_n / (jnp.sqrt(pdx ** 2 + pdy ** 2 + 1.0) *
                   jnp.sqrt(ddx ** 2 + ddy ** 2 + 1.0))
    loss_normal = jnp.mean(jnp.abs(1.0 - cos))
    return loss_depth + loss_normal + (loss_dx + loss_dy)


if __name__ == "__main__":
    key = jax.random.PRNGKey(0)
    k1, k2 = jax.random.split(key)

    B, C, H, W = 2, 3, 16, 16
    output = jax.random.normal(k1, (B, C, H, W), dtype=jnp.float32)
    # ground-truth depth map at a different resolution (exercises the resize)
    gt = jax.random.uniform(k2, (B, 1, 20, 20), dtype=jnp.float32) * 5.0 + 0.1

    loss = depth_combined_loss(output, gt)
    jax.block_until_ready(loss)

    ref = _reference_loss(output, gt)
    assert jnp.allclose(loss, ref, rtol=5e-4, atol=1e-5), (loss, ref)

    print("KERNEL_OK")
</pallas_src>

<mosaic_0001>
module attributes {stable_mosaic.version = 11 : i64} {
  func.func @_depth_loss_kernel(%arg0: i32, %arg1: memref<1x24x128xf32, #tpu.memory_space<vmem>>, %arg2: memref<1x24x128xf32, #tpu.memory_space<vmem>>, %arg3: memref<1x8x128xf32, #tpu.memory_space<vmem>>) attributes {dimension_semantics = [#tpu.dimension_semantics<parallel>], iteration_bounds = array<i64: 2>, scalar_prefetch = 0 : i64, scratch_operands = 0 : i64, tpu.core_type = #tpu.core_type<tc>, window_params = [{transform_indices = @transform_0, window_bounds = array<i64: 1, 24, 128>}, {transform_indices = @transform_1, window_bounds = array<i64: 1, 24, 128>}, {transform_indices = @transform_2, window_bounds = array<i64: 1, 8, 128>}]} {
    %c0 = arith.constant 0 : index
    %c0_0 = arith.constant 0 : index
    %c0_1 = arith.constant 0 : index
    %0 = vector.load %arg1[%c0, %c0_0, %c0_1] : memref<1x24x128xf32, #tpu.memory_space<vmem>>, vector<1x24x128xf32>
    %1 = vector.shape_cast %0 : vector<1x24x128xf32> to vector<24x128xf32>
    %c0_2 = arith.constant 0 : index
    %c0_3 = arith.constant 0 : index
    %c0_4 = arith.constant 0 : index
    %2 = vector.load %arg2[%c0_2, %c0_3, %c0_4] : memref<1x24x128xf32, #tpu.memory_space<vmem>>, vector<1x24x128xf32>
    %3 = vector.shape_cast %2 : vector<1x24x128xf32> to vector<24x128xf32>
    %c1_i32 = arith.constant 1 : i32
    %4 = tpu.dynamic_rotate %1 by %c1_i32 dim 1 : vector<24x128xf32>, i32 -> vector<24x128xf32>
    %c127_i32 = arith.constant 127 : i32
    %5 = tpu.dynamic_rotate %1 by %c127_i32 dim 1 : vector<24x128xf32>, i32 -> vector<24x128xf32>
    %6 = arith.subf %4, %5 : vector<24x128xf32>
    %cst = arith.constant 2.000000e+00 : f32
    %7 = vector.broadcast %cst : f32 to vector<24x128xf32>
    %8 = arith.mulf %7, %1 : vector<24x128xf32>
    %9 = arith.addf %4, %8 : vector<24x128xf32>
    %10 = arith.addf %9, %5 : vector<24x128xf32>
    %c1_i32_5 = arith.constant 1 : i32
    %11 = tpu.dynamic_rotate %6 by %c1_i32_5 dim 0 : vector<24x128xf32>, i32 -> vector<24x128xf32>
    %c23_i32 = arith.constant 23 : i32
    %12 = tpu.dynamic_rotate %6 by %c23_i32 dim 0 : vector<24x128xf32>, i32 -> vector<24x128xf32>
    %c1_i32_6 = arith.constant 1 : i32
    %13 = tpu.dynamic_rotate %10 by %c1_i32_6 dim 0 : vector<24x128xf32>, i32 -> vector<24x128xf32>
    %c23_i32_7 = arith.constant 23 : i32
    %14 = tpu.dynamic_rotate %10 by %c23_i32_7 dim 0 : vector<24x128xf32>, i32 -> vector<24x128xf32>
    %cst_8 = arith.constant 2.000000e+00 : f32
    %15 = vector.broadcast %cst_8 : f32 to vector<24x128xf32>
    %16 = arith.mulf %15, %6 : vector<24x128xf32>
    %17 = arith.addf %11, %16 : vector<24x128xf32>
    %18 = arith.addf %17, %12 : vector<24x128xf32>
    %19 = arith.subf %13, %14 : vector<24x128xf32>
    %c1_i32_9 = arith.constant 1 : i32
    %20 = tpu.dynamic_rotate %3 by %c1_i32_9 dim 1 : vector<24x128xf32>, i32 -> vector<24x128xf32>
    %c127_i32_10 = arith.constant 127 : i32
    %21 = tpu.dynamic_rotate %3 by %c127_i32_10 dim 1 : vector<24x128xf32>, i32 -> vector<24x128xf32>
    %22 = arith.subf %20, %21 : vector<24x128xf32>
    %cst_11 = arith.constant 2.000000e+00 : f32
    %23 = vector.broadcast %cst_11 : f32 to vector<24x128xf32>
    %24 = arith.mulf %23, %3 : vector<24x128xf32>
    %25 = arith.addf %20, %24 : vector<24x128xf32>
    %26 = arith.addf %25, %21 : vector<24x128xf32>
    %c1_i32_12 = arith.constant 1 : i32
    %27 = tpu.dynamic_rotate %22 by %c1_i32_12 dim 0 : vector<24x128xf32>, i32 -> vector<24x128xf32>
    %c23_i32_13 = arith.constant 23 : i32
    %28 = tpu.dynamic_rotate %22 by %c23_i32_13 dim 0 : vector<24x128xf32>, i32 -> vector<24x128xf32>
    %c1_i32_14 = arith.constant 1 : i32
    %29 = tpu.dynamic_rotate %26 by %c1_i32_14 dim 0 : vector<24x128xf32>, i32 -> vector<24x128xf32>
    %c23_i32_15 = arith.constant 23 : i32
    %30 = tpu.dynamic_rotate %26 by %c23_i32_15 dim 0 : vector<24x128xf32>, i32 -> vector<24x128xf32>
    %cst_16 = arith.constant 2.000000e+00 : f32
    %31 = vector.broadcast %cst_16 : f32 to vector<24x128xf32>
    %32 = arith.mulf %31, %22 : vector<24x128xf32>
    %33 = arith.addf %27, %32 : vector<24x128xf32>
    %34 = arith.addf %33, %28 : vector<24x128xf32>
    %35 = arith.subf %29, %30 : vector<24x128xf32>
    %36 = arith.subf %1, %3 : vector<24x128xf32>
    %37 = math.absf %36 : vector<24x128xf32>
    %cst_17 = arith.constant 5.000000e-01 : f32
    %38 = vector.broadcast %cst_17 : f32 to vector<24x128xf32>
    %39 = arith.addf %37, %38 : vector<24x128xf32>
    %40 = arith.subf %18, %34 : vector<24x128xf32>
    %41 = math.absf %40 : vector<24x128xf32>
    %cst_18 = arith.constant 5.000000e-01 : f32
    %42 = vector.broadcast %cst_18 : f32 to vector<24x128xf32>
    %43 = arith.addf %41, %42 : vector<24x128xf32>
    %44 = arith.subf %19, %35 : vector<24x128xf32>
    %45 = math.absf %44 : vector<24x128xf32>
    %cst_19 = arith.constant 5.000000e-01 : f32
    %46 = vector.broadcast %cst_19 : f32 to vector<24x128xf32>
    %47 = arith.addf %45, %46 : vector<24x128xf32>
    %48 = arith.mulf %39, %43 : vector<24x128xf32>
    %49 = arith.mulf %48, %47 : vector<24x128xf32>
    %50 = math.log %49 : vector<24x128xf32>
    %51 = arith.mulf %18, %34 : vector<24x128xf32>
    %52 = arith.mulf %19, %35 : vector<24x128xf32>
    %53 = arith.addf %51, %52 : vector<24x128xf32>
    %cst_20 = arith.constant 1.000000e+00 : f32
    %54 = vector.broadcast %cst_20 : f32 to vector<24x128xf32>
    %55 = arith.addf %53, %54 : vector<24x128xf32>
    %56 = arith.mulf %18, %18 : vector<24x128xf32>
    %57 = arith.mulf %19, %19 : vector<24x128xf32>
    %58 = arith.addf %56, %57 : vector<24x128xf32>
    %cst_21 = arith.constant 1.000000e+00 : f32
    %59 = vector.broadcast %cst_21 : f32 to vector<24x128xf32>
    %60 = arith.addf %58, %59 : vector<24x128xf32>
    %61 = arith.mulf %34, %34 : vector<24x128xf32>
    %62 = arith.mulf %35, %35 : vector<24x128xf32>
    %63 = arith.addf %61, %62 : vector<24x128xf32>
    %cst_22 = arith.constant 1.000000e+00 : f32
    %64 = vector.broadcast %cst_22 : f32 to vector<24x128xf32>
    %65 = arith.addf %63, %64 : vector<24x128xf32>
    %66 = arith.mulf %60, %65 : vector<24x128xf32>
    %67 = math.rsqrt %66 : vector<24x128xf32>
    %68 = arith.mulf %55, %67 : vector<24x128xf32>
    %cst_23 = arith.constant 1.000000e+00 : f32
    %69 = vector.broadcast %cst_23 : f32 to vector<24x128xf32>
    %70 = arith.subf %69, %68 : vector<24x128xf32>
    %71 = math.absf %70 : vector<24x128xf32>
    %72 = arith.addf %50, %71 : vector<24x128xf32>
    %73 = tpu.iota {dimensions = array<i32: 0>} : vector<24x128xi32>
    %74 = tpu.iota {dimensions = array<i32: 1>} : vector<24x128xi32>
    %c16_i32 = arith.constant 16 : i32
    %75 = vector.broadcast %c16_i32 : i32 to vector<24x128xi32>
    %76 = arith.cmpi slt, %73, %75 : vector<24x128xi32>
    %c16_i32_24 = arith.constant 16 : i32
    %77 = vector.broadcast %c16_i32_24 : i32 to vector<24x128xi32>
    %78 = arith.cmpi slt, %74, %77 : vector<24x128xi32>
    %79 = arith.andi %76, %78 : vector<24x128xi1>
    %cst_25 = arith.constant 0.000000e+00 : f32
    %80 = vector.broadcast %cst_25 : f32 to vector<24x128xf32>
    %81 = arith.select %79, %72, %80 : vector<24x128xi1>, vector<24x128xf32>
    %82 = vector.shape_cast %81 : vector<24x128xf32> to vector<1x24x128xf32>
    %cst_26 = arith.constant dense<0.000000e+00> : vector<1xf32>
    %83 = vector.multi_reduction <add>, %82, %cst_26 [1, 2] : vector<1x24x128xf32> to vector<1xf32>
    %84 = vector.shape_cast %83 : vector<1xf32> to vector<1x1x1xf32>
    %85 = vector.extract %84[0, 0, 0] : f32 from vector<1x1x1xf32>
    %86 = vector.broadcast %85 : f32 to vector<8x128xf32>
    %c0_27 = arith.constant 0 : index
    %c0_28 = arith.constant 0 : index
    %c0_29 = arith.constant 0 : index
    %87 = vector.load %arg3[%c0_27, %c0_28, %c0_29] : memref<1x8x128xf32, #tpu.memory_space<vmem>>, vector<1x8x128xf32>
    %88 = vector.shape_cast %87 : vector<1x8x128xf32> to vector<8x128xf32>
    %89 = vector.shape_cast %86 : vector<8x128xf32> to vector<1x8x128xf32>
    tpu.vector_store %arg3[%c0_27, %c0_28, %c0_29], %89 {strides = array<i32>} : memref<1x8x128xf32, #tpu.memory_space<vmem>>, vector<1x8x128xf32>,
    return
  }
  func.func @transform_0(%arg0: i32) -> (i32, i32, i32) {
    %c0_i32 = arith.constant 0 : i32
    %c0_i32_0 = arith.constant 0 : i32
    %c0_i32_1 = arith.constant 0 : i32
    return %arg0, %c0_i32, %c0_i32_0 : i32, i32, i32
  }
  func.func @transform_1(%arg0: i32) -> (i32, i32, i32) {
    %c0_i32 = arith.constant 0 : i32
    %c0_i32_0 = arith.constant 0 : i32
    %c0_i32_1 = arith.constant 0 : i32
    return %arg0, %c0_i32, %c0_i32_0 : i32, i32, i32
  }
  func.func @transform_2(%arg0: i32) -> (i32, i32, i32) {
    %c0_i32 = arith.constant 0 : i32
    %c0_i32_0 = arith.constant 0 : i32
    %c0_i32_1 = arith.constant 0 : i32
    return %arg0, %c0_i32, %c0_i32_0 : i32, i32, i32
  }
}

</mosaic_0001>

<llo_original>
// kernel: tpu_custom_call.1
$region0: #{tpu_custom_call.1}
  #allocation0 [shape = 'u32[]', space=smem, size = 0x4, offset = 0x4, fixed_abs, tag = 'smem constant byte address 0x4 - core index']
  #allocation1 [shape = 'u32[144,128]{1,0:T(1,128)}', space=vmem, size = 0x12000, scoped, tag = 'internal scratch']
  %s0 = inlined_call_operand.hbm [shape: f32[2,24,128], index: 0, kind: input, shape index: {}]
  %s1 = inlined_call_operand.hbm [shape: f32[2,24,128], index: 1, kind: input, shape index: {}]
  %s2 = inlined_call_operand.hbm [shape: f32[2,8,128], index: 2, kind: output, shape index: {}]
  %s3 = sld [smem:[#allocation0]]
  $region49: #{tpu_custom_call.1} parent=0
    _
  %s5 = ssub.s32 1, %s3
  %s6 = scalar_select 0, %s5, %s3
  $region1: #{tpu_custom_call.1} parent=0
    #allocation2 [shape = 'u8[24576]{0}', space=vmem, size = 0x6000, scoped, tag = 'input window, operand 0']
    #allocation3 [shape = 's32[2]{0}', space=sflag, size = 0x8, scoped, tag = 'scoped memory for tpu_custom_call.1']
    #allocation4 [shape = 's32[2]{0}', space=sflag, size = 0x8, scoped, tag = 'scoped memory for tpu_custom_call.1']
    #allocation5 [shape = 'u8[24576]{0}', space=vmem, size = 0x6000, scoped, tag = 'input window, operand 1']
    #allocation6 [shape = 's32[2]{0}', space=sflag, size = 0x8, scoped, tag = 'scoped memory for tpu_custom_call.1']
    #allocation7 [shape = 'u8[8192]{0}', space=vmem, size = 0x2000, scoped, tag = 'output window, operand 0']
    %7 = vsyncpa [#allocation3], 0
    %s8 = scalar_lea.sflag [#allocation3], 1
    %9 = vsyncpa %s8, 0
    %10 = vsyncpa [#allocation6], 0
    %s11 = scalar_lea.sflag [#allocation6], 1
    %12 = vsyncpa %s11, 0
    %13 = vsyncpa [#allocation4], 0
    %s14 = scalar_lea.sflag [#allocation4], 1
    %15 = vsyncpa %s14, 0
    loop: start=0, step=1, limit=4
    $region2: #{tpu_custom_call.1} parent=1 // loop_pre_header
      _
    $region3: #{tpu_custom_call.1} parent=1 // loop_header
      %s17 = sphi 0, %s21
      %p18 = scmp.ge.s32.totalorder %s17, 4
      %s27 = sphi 0, %s29
      %s30 = sphi 0, %s27
      %s31 = sphi 0, %s30
      %s47 = sphi 0, %s31
      %s53 = sphi 0, %s55
      %s56 = sphi 0, %s53
      %s57 = sphi 0, %s56
      %s73 = sphi 0, %s57
      %s79 = sphi 0, %s81
      %s82 = sphi 0, %s79
      %s83 = sphi 0, %s82
      %s99 = sphi 0, %s83
    $region4: #{tpu_custom_call.1} parent=1 // loop_header_branch
      %20 = sbr.rel (%p18) target = $region8
    $region5: #{tpu_custom_call.1} parent=1 // loop_body
      %s22 = ssub.s32 %s17, 1
      %s23 = ssub.s32 %s17, 2
      %s24 = sadd.s32 %s17, 1
      %s25 = ssub.s32 %s17, %s24
      %p26 = scmp.eq.s32.totalorder %s25, 0
      %s28 = sadd.s32 %s27, 1
      %s29 = scalar_select %p26, %s27, %s28
      %p32 = pneg %p26
      %p33 = scmp.eq.s32.totalorder %s17, 1
      %p34 = por %p32, %p33
      %p35 = scmp.ne.s32.totalorder %s27, %s30
      %p36 = scmp.eq.s32.totalorder %s17, 0
      %p37 = por %p35, %p36
      %p38 = scmp.ne.s32.totalorder %s27, %s30
      %p39 = scmp.eq.s32.totalorder %s22, 1
      %p40 = por %p38, %p39
      %p41 = scmp.ne.s32.totalorder %s30, %s31
      %p42 = scmp.eq.s32.totalorder %s22, 0
      %p43 = por %p41, %p42
      %p44 = scmp.ne.s32.totalorder %s30, %s31
      %p45 = scmp.eq.s32.totalorder %s23, 1
      %p46 = por %p44, %p45
      %p48 = scmp.ne.s32.totalorder %s31, %s47
      %p49 = scmp.eq.s32.totalorder %s23, 0
      %p50 = por %p48, %p49
      %s51 = ssub.s32 %s17, %s24
      %p52 = scmp.eq.s32.totalorder %s51, 0
      %s54 = sadd.s32 %s53, 1
      %s55 = scalar_select %p52, %s53, %s54
      %p58 = pneg %p52
      %p59 = scmp.eq.s32.totalorder %s17, 1
      %p60 = por %p58, %p59
      %p61 = scmp.ne.s32.totalorder %s53, %s56
      %p62 = scmp.eq.s32.totalorder %s17, 0
      %p63 = por %p61, %p62
      %p64 = scmp.ne.s32.totalorder %s53, %s56
      %p65 = scmp.eq.s32.totalorder %s22, 1
      %p66 = por %p64, %p65
      %p67 = scmp.ne.s32.totalorder %s56, %s57
      %p68 = scmp.eq.s32.totalorder %s22, 0
      %p69 = por %p67, %p68
      %p70 = scmp.ne.s32.totalorder %s56, %s57
      %p71 = scmp.eq.s32.totalorder %s23, 1
      %p72 = por %p70, %p71
      %p74 = scmp.ne.s32.totalorder %s57, %s73
      %p75 = scmp.eq.s32.totalorder %s23, 0
      %p76 = por %p74, %p75
      %s77 = ssub.s32 %s17, %s24
      %p78 = scmp.eq.s32.totalorder %s77, 0
      %s80 = sadd.s32 %s79, 1
      %s81 = scalar_select %p78, %s79, %s80
      %p84 = pneg %p78
      %p85 = scmp.eq.s32.totalorder %s17, 1
      %p86 = por %p84, %p85
      %p87 = scmp.ne.s32.totalorder %s79, %s82
      %p88 = scmp.eq.s32.totalorder %s17, 0
      %p89 = por %p87, %p88
      %p90 = scmp.ne.s32.totalorder %s79, %s82
      %p91 = scmp.eq.s32.totalorder %s22, 1
      %p92 = por %p90, %p91
      %p93 = scmp.ne.s32.totalorder %s82, %s83
      %p94 = scmp.eq.s32.totalorder %s22, 0
      %p95 = por %p93, %p94
      %p96 = scmp.ne.s32.totalorder %s82, %s83
      %p97 = scmp.eq.s32.totalorder %s23, 1
      %p98 = por %p96, %p97
      %p100 = scmp.ne.s32.totalorder %s83, %s99
      %p101 = scmp.eq.s32.totalorder %s23, 0
      %p102 = por %p100, %p101
      %p103 = scmp.le.s32.totalorder 1, %s17
      %p104 = scmp.lt.s32.totalorder %s17, 3
      %p105 = pnand %p103, %p104
      %p106 = pneg %p105
      // Predicated region
      $region9: #{tpu_custom_call.1} parent=5 // pred_check
        _
      $region10: #{tpu_custom_call.1} parent=5 // pred_check_branch
        %108 = sbr.rel (%p105) target = $region12
      $region11: #{tpu_custom_call.1} parent=5 // pred_region
        %s109 = ssub.s32 %s17, 1
      $region12: #{tpu_custom_call.1} parent=5 // pred_fallthru
        _
      %p110 = scmp.lt.s32.totalorder %s17, 2
      // Predicated region
      $region13: #{tpu_custom_call.1} parent=5 // pred_check
        %p111 = pneg %p110
      $region14: #{tpu_custom_call.1} parent=5 // pred_check_branch
        %113 = sbr.rel (%p111) target = $region16
      $region15: #{tpu_custom_call.1} parent=5 // pred_region
        // Predicated region
        $region17: #{tpu_custom_call.1} parent=15 // pred_check
          %p114 = pneg %p37
        $region18: #{tpu_custom_call.1} parent=15 // pred_check_branch
          %116 = sbr.rel (%p114) target = $region20
        $region19: #{tpu_custom_call.1} parent=15 // pred_region
          %s117 = sand.u32 %s27, 1
          %s118 = scalar_lea.sflag [#allocation3], %s117
          %s119 = sand.u32 %s27, 1
          %s120 = smul.addr %s119, 24
          %s121 = scalar_lea.vmem [#allocation2], %s120
          %s123 = ssub.s32 384, 384
          %124 = vsyncadd %s118, %s123
          %s125 = smul.addr %s17, 3
          %s126 = smul.addr %s125, 128
          %s127 = scalar_lea.hbm %s0, %s126
          %s128 = sshll.u32 %s121, 4
          %s129 = int_to_ptr.vmem [resolvable:$true] %s128
          %134 = dma.hbm_to_vmem [thread:$0]  %s127, 384, %s129, %s118, 128, 128, 8
        $region20: #{tpu_custom_call.1} parent=15 // pred_fallthru
          _
        // Predicated region
        $region21: #{tpu_custom_call.1} parent=15 // pred_check
          %p135 = pneg %p63
        $region22: #{tpu_custom_call.1} parent=15 // pred_check_branch
          %137 = sbr.rel (%p135) target = $region24
        $region23: #{tpu_custom_call.1} parent=15 // pred_region
          %s138 = sand.u32 %s53, 1
          %s139 = scalar_lea.sflag [#allocation6], %s138
          %s140 = sand.u32 %s53, 1
          %s141 = smul.addr %s140, 24
          %s142 = scalar_lea.vmem [#allocation5], %s141
          %s144 = ssub.s32 384, 384
          %145 = vsyncadd %s139, %s144
          %s146 = smul.addr %s17, 3
          %s147 = smul.addr %s146, 128
          %s148 = scalar_lea.hbm %s1, %s147
          %s149 = sshll.u32 %s142, 4
          %s150 = int_to_ptr.vmem [resolvable:$true] %s149
          %155 = dma.hbm_to_vmem [thread:$0]  %s148, 384, %s150, %s139, 128, 128, 8
        $region24: #{tpu_custom_call.1} parent=15 // pred_fallthru
          _
      $region16: #{tpu_custom_call.1} parent=5 // pred_fallthru
        _
      %p156 = scmp.le.s32.totalorder 1, %s17
      %p157 = scmp.lt.s32.totalorder %s17, 3
      %p158 = pnand %p156, %p157
      %p159 = pneg %p158
      // Predicated region
      $region25: #{tpu_custom_call.1} parent=5 // pred_check
        _
      $region26: #{tpu_custom_call.1} parent=5 // pred_check_branch
        %161 = sbr.rel (%p158) target = $region28
      $region27: #{tpu_custom_call.1} parent=5 // pred_region
        %s162 = ssub.s32 %s17, 1
        %s163 = sand.u32 %s30, 1
        %s164 = scalar_lea.sflag [#allocation3], %s163
        %s165 = sand.u32 %s30, 1
        %s166 = smul.addr %s165, 24
        %s167 = scalar_lea.vmem [#allocation2], %s166
        // Predicated region
        $region29: #{tpu_custom_call.1} parent=27 // pred_check
          %p168 = pneg %p43
        $region30: #{tpu_custom_call.1} parent=27 // pred_check_branch
          %170 = sbr.rel (%p168) target = $region32
        $region31: #{tpu_custom_call.1} parent=27 // pred_region
          %171 = dma.done %s164, 384
        $region32: #{tpu_custom_call.1} parent=27 // pred_fallthru
          _
        %s172 = sand.u32 %s56, 1
        %s173 = scalar_lea.sflag [#allocation6], %s172
        %s174 = sand.u32 %s56, 1
        %s175 = smul.addr %s174, 24
        %s176 = scalar_lea.vmem [#allocation5], %s175
        // Predicated region
        $region33: #{tpu_custom_call.1} parent=27 // pred_check
          %p177 = pneg %p69
        $region34: #{tpu_custom_call.1} parent=27 // pred_check_branch
          %179 = sbr.rel (%p177) target = $region36
        $region35: #{tpu_custom_call.1} parent=27 // pred_region
          %180 = dma.done %s173, 384
        $region36: #{tpu_custom_call.1} parent=27 // pred_fallthru
          _
        %s181 = sand.u32 %s30, 1
        %s182 = scalar_lea.sflag [#allocation3], %s181
        %s183 = sand.u32 %s30, 1
        %s184 = smul.addr %s183, 24
        %s185 = scalar_lea.vmem [#allocation2], %s184
        %p186 = pneg %p43
        %p187 = pneg %p40
        %s188 = sand.u32 %s56, 1
        %s189 = scalar_lea.sflag [#allocation6], %s188
        %s190 = sand.u32 %s56, 1
        %s191 = smul.addr %s190, 24
        %s192 = scalar_lea.vmem [#allocation5], %s191
        %p193 = pneg %p69
        %p194 = pneg %p66
        %p195 = pneg %p95
        %p196 = pneg %p92
        %s197 = sand.u32 %s82, 1
        %s198 = scalar_lea.sflag [#allocation4], %s197
        %s199 = sand.u32 %s82, 1
        %s200 = smul.addr %s199, 8
        %s201 = scalar_lea.vmem [#allocation7], %s200
        %v202 = vld [vmem:[%s167] sm:$0xff]
        %v203 = vld [vmem:[%s167 + $0x8] sm:$0xff]
        %v204 = vld [vmem:[%s167 + $0x10] sm:$0xff]
        %v205 = vld [vmem:[%s176] sm:$0xff]
        %v206 = vld [vmem:[%s176 + $0x8] sm:$0xff]
        %v207 = vld [vmem:[%s176 + $0x10] sm:$0xff]
        %208 = vrot.lane.b32.xlu0 %v202, 1
        %v209 = vpop.permute.xlu0 %208
        %210 = vrot.lane.b32.xlu0 %v203, 1
        %v211 = vpop.permute.xlu0 %210
        %212 = vrot.lane.b32.xlu0 %v204, 1
        %v213 = vpop.permute.xlu0 %212
        %214 = vrot.lane.b32.xlu0 %v202, 127
        %v215 = vpop.permute.xlu0 %214
        %216 = vrot.lane.b32.xlu0 %v203, 127
        %v217 = vpop.permute.xlu0 %216
        %218 = vrot.lane.b32.xlu0 %v204, 127
        %v219 = vpop.permute.xlu0 %218
        %v220 = vsub.f32 %v209, %v215
        %v221 = vsub.f32 %v211, %v217
        %v222 = vsub.f32 %v213, %v219
        %v223 = vmul.f32 %v202, 2.0
        %v224 = vmul.f32 %v203, 2.0
        %v225 = vmul.f32 %v204, 2.0
        %v226 = vadd.f32 %v209, %v223
        %v227 = vadd.f32 %v211, %v224
        %v228 = vadd.f32 %v213, %v225
        %v229 = vadd.f32 %v226, %v215
        %v230 = vadd.f32 %v227, %v217
        %v231 = vadd.f32 %v228, %v219
        %v232 = vrot.slane %v220, 7
        %v233 = vrot.slane %v221, 7
        %v234 = vrot.slane %v222, 7
        %v235 = vlaneseq
        %v236 = vshrl.u32 %v235, 7
        %vm237 = vcmp.lt.s32.totalorder %v236, 1
        %v238 = vsel %vm237, %v233, %v234
        %v239 = vsel %vm237, %v232, %v233
        %v240 = vsel %vm237, %v234, %v232
        %v241 = vrot.slane %v220, 1
        %v242 = vrot.slane %v221, 1
        %v243 = vrot.slane %v222, 1
        %vm244 = vcmp.lt.s32.totalorder %v236, 7
        %v245 = vsel %vm244, %v242, %v243
        %v246 = vsel %vm244, %v241, %v242
        %v247 = vsel %vm244, %v243, %v241
        %v248 = vrot.slane %v229, 7
        %v249 = vrot.slane %v230, 7
        %v250 = vrot.slane %v231, 7
        %v251 = vsel %vm237, %v249, %v250
        %v252 = vsel %vm237, %v248, %v249
        %v253 = vsel %vm237, %v250, %v248
        %v254 = vrot.slane %v229, 1
        %v255 = vrot.slane %v230, 1
        %v256 = vrot.slane %v231, 1
        %v257 = vsel %vm244, %v255, %v256
        %v258 = vsel %vm244, %v254, %v255
        %v259 = vsel %vm244, %v256, %v254
        %v260 = vmul.f32 %v220, 2.0
        %v261 = vmul.f32 %v221, 2.0
        %v262 = vmul.f32 %v222, 2.0
        %v263 = vadd.f32 %v240, %v260
        %v264 = vadd.f32 %v239, %v261
        %v265 = vadd.f32 %v238, %v262
        %v266 = vadd.f32 %v263, %v246
        %v267 = vadd.f32 %v264, %v245
        %v268 = vadd.f32 %v265, %v247
        %v269 = vsub.f32 %v253, %v258
        %v270 = vsub.f32 %v252, %v257
        %v271 = vsub.f32 %v251, %v259
        %272 = vrot.lane.b32.xlu0 %v205, 1
        %v273 = vpop.permute.xlu0 %272
        %274 = vrot.lane.b32.xlu0 %v206, 1
        %v275 = vpop.permute.xlu0 %274
        %276 = vrot.lane.b32.xlu0 %v207, 1
        %v277 = vpop.permute.xlu0 %276
        %278 = vrot.lane.b32.xlu0 %v205, 127
        %v279 = vpop.permute.xlu0 %278
        %280 = vrot.lane.b32.xlu0 %v206, 127
        %v281 = vpop.permute.xlu0 %280
        %282 = vrot.lane.b32.xlu0 %v207, 127
        %v283 = vpop.permute.xlu0 %282
        %v284 = vsub.f32 %v273, %v279
        %v285 = vsub.f32 %v275, %v281
        %v286 = vsub.f32 %v277, %v283
        %v287 = vmul.f32 %v205, 2.0
        %v288 = vmul.f32 %v206, 2.0
        %v289 = vmul.f32 %v207, 2.0
        %v290 = vadd.f32 %v273, %v287
        %v291 = vadd.f32 %v275, %v288
        %v292 = vadd.f32 %v277, %v289
        %v293 = vadd.f32 %v290, %v279
        %v294 = vadd.f32 %v291, %v281
        %v295 = vadd.f32 %v292, %v283
        %v296 = vrot.slane %v284, 7
        %v297 = vrot.slane %v285, 7
        %v298 = vrot.slane %v286, 7
        %v299 = vsel %vm237, %v297, %v298
        %v300 = vsel %vm237, %v296, %v297
        %v301 = vsel %vm237, %v298, %v296
        %v302 = vrot.slane %v284, 1
        %v303 = vrot.slane %v285, 1
        %v304 = vrot.slane %v286, 1
        %v305 = vsel %vm244, %v303, %v304
        %v306 = vsel %vm244, %v302, %v303
        %v307 = vsel %vm244, %v304, %v302
        %v308 = vrot.slane %v293, 7
        %v309 = vrot.slane %v294, 7
        %v310 = vrot.slane %v295, 7
        %v311 = vsel %vm237, %v309, %v310
        %v312 = vsel %vm237, %v308, %v309
        %v313 = vsel %vm237, %v310, %v308
        %v314 = vrot.slane %v293, 1
        %v315 = vrot.slane %v294, 1
        %v316 = vrot.slane %v295, 1
        %v317 = vsel %vm244, %v315, %v316
        %v318 = vsel %vm244, %v314, %v315
        %v319 = vsel %vm244, %v316, %v314
        %v320 = vmul.f32 %v284, 2.0
        %v321 = vmul.f32 %v285, 2.0
        %v322 = vmul.f32 %v286, 2.0
        %v323 = vadd.f32 %v301, %v320
        %v324 = vadd.f32 %v300, %v321
        %v325 = vadd.f32 %v299, %v322
        %v326 = vadd.f32 %v323, %v306
        %v327 = vadd.f32 %v324, %v305
        %v328 = vadd.f32 %v325, %v307
        %v329 = vsub.f32 %v313, %v318
        %v330 = vsub.f32 %v312, %v317
        %v331 = vsub.f32 %v311, %v319
        %v332 = vsub.f32 %v202, %v205
        %v333 = vsub.f32 %v203, %v206
        %v334 = vsub.f32 %v204, %v207
        %v335 = vand.u32 2147483647, %v332
        %v336 = vand.u32 2147483647, %v333
        %v337 = vand.u32 2147483647, %v334
        %v338 = vadd.f32 %v335, 0.5
        %v339 = vadd.f32 %v336, 0.5
        %v340 = vadd.f32 %v337, 0.5
        %v341 = vsub.f32 %v266, %v326
        %v342 = vsub.f32 %v267, %v327
        %v343 = vsub.f32 %v268, %v328
        %v344 = vand.u32 2147483647, %v341
        %v345 = vand.u32 2147483647, %v342
        %v346 = vand.u32 2147483647, %v343
        %v347 = vadd.f32 %v344, 0.5
        %v348 = vadd.f32 %v345, 0.5
        %v349 = vadd.f32 %v346, 0.5
        %v350 = vsub.f32 %v269, %v329
        %v351 = vsub.f32 %v270, %v330
        %v352 = vsub.f32 %v271, %v331
        %v353 = vand.u32 2147483647, %v350
        %v354 = vand.u32 2147483647, %v351
        %v355 = vand.u32 2147483647, %v352
        %v356 = vadd.f32 %v353, 0.5
        %v357 = vadd.f32 %v354, 0.5
        %v358 = vadd.f32 %v355, 0.5
        %v359 = vmul.f32 %v338, %v347
        %v360 = vmul.f32 %v339, %v348
        %v361 = vmul.f32 %v340, %v349
        %v362 = vmul.f32 %v359, %v356
        %v363 = vmul.f32 %v360, %v357
        %v364 = vmul.f32 %v361, %v358
        %v365 = vlog2.pop %v362
        %v366 = vmul.f32 %v365, 0.6931472
        %v367 = vlog2.pop %v363
        %v368 = vmul.f32 %v367, 0.6931472
        %v369 = vlog2.pop %v364
        %v370 = vmul.f32 %v369, 0.6931472
        %v371 = vmul.f32 %v266, %v326
        %v372 = vmul.f32 %v267, %v327
        %v373 = vmul.f32 %v268, %v328
        %v374 = vmul.f32 %v269, %v329
        %v375 = vmul.f32 %v270, %v330
        %v376 = vmul.f32 %v271, %v331
        %v377 = vadd.f32 %v371, %v374
        %v378 = vadd.f32 %v372, %v375
        %v379 = vadd.f32 %v373, %v376
        %v380 = vadd.f32 %v377, 1.0
        %v381 = vadd.f32 %v378, 1.0
        %v382 = vadd.f32 %v379, 1.0
        %v383 = vmul.f32 %v266, %v266
        %v384 = vmul.f32 %v267, %v267
        %v385 = vmul.f32 %v268, %v268
        %v386 = vmul.f32 %v269, %v269
        %v387 = vmul.f32 %v270, %v270
        %v388 = vmul.f32 %v271, %v271
        %v389 = vadd.f32 %v383, %v386
        %v390 = vadd.f32 %v384, %v387
        %v391 = vadd.f32 %v385, %v388
        %v392 = vadd.f32 %v389, 1.0
        %v393 = vadd.f32 %v390, 1.0
        %v394 = vadd.f32 %v391, 1.0
        %v395 = vmul.f32 %v326, %v326
        %v396 = vmul.f32 %v327, %v327
        %v397 = vmul.f32 %v328, %v328
        %v398 = vmul.f32 %v329, %v329
        %v399 = vmul.f32 %v330, %v330
        %v400 = vmul.f32 %v331, %v331
        %v401 = vadd.f32 %v395, %v398
        %v402 = vadd.f32 %v396, %v399
        %v403 = vadd.f32 %v397, %v400
        %v404 = vadd.f32 %v401, 1.0
        %v405 = vadd.f32 %v402, 1.0
        %v406 = vadd.f32 %v403, 1.0
        %v407 = vmul.f32 %v392, %v404
        %v408 = vmul.f32 %v393, %v405
        %v409 = vmul.f32 %v394, %v406
        %v410 = vrsqrt.pop %v407
        %v411 = vrsqrt.pop %v408
        %v412 = vrsqrt.pop %v409
        %v413 = vmul.f32 %v380, %v410
        %v414 = vmul.f32 %v381, %v411
        %v415 = vmul.f32 %v382, %v412
        %v416 = vsub.f32 1.0, %v413
        %v417 = vsub.f32 1.0, %v414
        %v418 = vsub.f32 1.0, %v415
        %v419 = vand.u32 2147483647, %v416
        %v420 = vand.u32 2147483647, %v417
        %v421 = vand.u32 2147483647, %v418
        %v422 = vadd.f32 %v366, %v419
        %v423 = vadd.f32 %v368, %v420
        %v424 = vadd.f32 %v370, %v421
        %v425 = vadd.s32 %v236, 8
        %v426 = vadd.s32 %v236, 16
        %v427 = vlaneseq
        %v428 = vand.u32 %v427, 127
        %vm429 = vcmp.lt.s32.totalorder %v236, 16
        %vm430 = vcmp.lt.s32.totalorder %v425, 16
        %vm431 = vcmp.lt.s32.totalorder %v426, 16
        %vm432 = vcmp.lt.s32.totalorder %v428, 16
        %vm433 = vmand %vm429, %vm432
        %vm434 = vmand %vm430, %vm432
        %vm435 = vmand %vm431, %vm432
        %v436 = vsel %vm433, %v422, 0.0
        %v437 = vsel %vm434, %v423, 0.0
        %v438 = vsel %vm435, %v424, 0.0
        %v439 = vadd.f32 %v436, %v437
        %v440 = vadd.f32 %v439, %v438
        %441 = vadd.xlane.f32.xlu0 %v440
        %v442 = vpop.xlane.xlu0 %441
        %v443 = vrot.slane %v442, 4
        %v444 = vadd.f32 %v442, %v443
        %v445 = vrot.slane %v444, 2
        %v446 = vadd.f32 %v444, %v445
        %v447 = vrot.slane %v446, 1
        %v448 = vadd.f32 %v446, %v447
        %s449 = vtos %v448
        %v450 = vstv %s449
        %451 = vst [vmem:[%s201] sm:$0xff] %v450
        %s452 = sand.u32 %s82, 1
        %s453 = scalar_lea.sflag [#allocation4], %s452
        %s454 = sand.u32 %s82, 1
        %s455 = smul.addr %s454, 8
        %s456 = scalar_lea.vmem [#allocation7], %s455
        // Predicated region
        $region37: #{tpu_custom_call.1} parent=27 // pred_check
          %p457 = pneg %p92
        $region38: #{tpu_custom_call.1} parent=27 // pred_check_branch
          %459 = sbr.rel (%p457) target = $region40
        $region39: #{tpu_custom_call.1} parent=27 // pred_region
          %s461 = ssub.s32 128, 128
          %462 = vsyncadd %s453, %s461
          %s463 = smul.addr %s22, 128
          %s464 = scalar_lea.hbm %s2, %s463
          %s466 = sshll.u32 %s456, 4
          %s467 = int_to_ptr.vmem [resolvable:$true] %s466
          %469 = dma.vmem_to_hbm [thread:$0]  %s467, 128, %s464, %s453
        $region40: #{tpu_custom_call.1} parent=27 // pred_fallthru
          _
      $region28: #{tpu_custom_call.1} parent=5 // pred_fallthru
        _
      %p470 = scmp.le.s32.totalorder 2, %s17
      // Predicated region
      $region41: #{tpu_custom_call.1} parent=5 // pred_check
        %p471 = pneg %p470
      $region42: #{tpu_custom_call.1} parent=5 // pred_check_branch
        %473 = sbr.rel (%p471) target = $region44
      $region43: #{tpu_custom_call.1} parent=5 // pred_region
        %s474 = ssub.s32 %s17, 2
        // Predicated region
        $region45: #{tpu_custom_call.1} parent=43 // pred_check
          %p475 = pneg %p98
        $region46: #{tpu_custom_call.1} parent=43 // pred_check_branch
          %477 = sbr.rel (%p475) target = $region48
        $region47: #{tpu_custom_call.1} parent=43 // pred_region
          %s478 = sand.u32 %s83, 1
          %s479 = scalar_lea.sflag [#allocation4], %s478
          %s480 = sand.u32 %s83, 1
          %s481 = smul.addr %s480, 8
          %s482 = scalar_lea.vmem [#allocation7], %s481
          %483 = dma.done %s479, 128
        $region48: #{tpu_custom_call.1} parent=43 // pred_fallthru
          _
      $region44: #{tpu_custom_call.1} parent=5 // pred_fallthru
        _
    $region6: #{tpu_custom_call.1} parent=1 // loop_footer
      %s21 = sadd.s32 1, %s17
    $region7: #{tpu_custom_call.1} parent=1 // loop_footer_branch
      %16 = sbr.rel target = $region3
    $region8: #{tpu_custom_call.1} parent=1 // loop_exit
      _
    %484 = vsyncpa [#allocation3], 1
    %s485 = scalar_lea.sflag [#allocation3], 1
    %486 = vsyncpa %s485, 1
    %487 = vsyncpa [#allocation6], 1
    %s488 = scalar_lea.sflag [#allocation6], 1
    %489 = vsyncpa %s488, 1
    %490 = vsyncpa [#allocation4], 1
    %s491 = scalar_lea.sflag [#allocation4], 1
    %492 = vsyncpa %s491, 1

</llo_original>
